<compile_context>
chip_gen: v5e
topology: v5e:2x2
jax: 0.10.0
libtpu: 0.0.40
codegen_flags: <defaults>
</compile_context>

<pallas_src>
from functools import partial

import jax
import jax.numpy as jnp
from jax.experimental import pallas as pl
from jax.experimental.pallas import tpu as pltpu


def num_branch_kernel(x_ref, w_ref, b_ref, out_ref, *, compute_dtype):
    x = x_ref[...]                                           # (TN, C, HW) f32
    if x.dtype != compute_dtype:
        x = x.astype(compute_dtype)

    # Numerically stable channel softmax fused with the global maxpool via LSE.
    cmax = jnp.max(x, axis=1, keepdims=True)                 # (TN, 1, HW)
    e = jnp.exp(x - cmax)                                    # EUP
    lse = cmax + jnp.log(jnp.sum(e, axis=1, keepdims=True))  # (TN, 1, HW)
    # exp is monotone, so max_hw(softmax) == exp(max_hw(x - lse)).  Exact.
    pooled = jnp.exp(jnp.max(x - lse, axis=2))               # (TN, C)

    # conv1x1 (C -> C//4) and Linear (C//4 -> nlane) fused into one matmul.
    y = jnp.dot(pooled.astype(jnp.bfloat16), w_ref[...],
                preferred_element_type=jnp.float32)          # (TN, NPAD)
    out_ref[...] = (y + b_ref[...]).astype(out_ref.dtype)


def _default_compute_dtype():
    """bf16 math on parts with bf16 VPU/EUP (v6e/v7x); f32 elsewhere (v5e)."""
    try:
        kind = jax.devices()[0].device_kind.lower()
    except Exception:
        return jnp.float32
    if ("v6" in kind) or ("v7" in kind):
        return jnp.bfloat16
    return jnp.float32


def _pick_tile_n(n, c, hw, in_itemsize, compute_itemsize,
                 budget_bytes=32 * 1024 * 1024):
    """Largest batch tile whose VMEM footprint (double-buffered input slab +
    ~3 compute-dtype (C,HW) intermediates) stays within `budget_bytes`."""
    per_row = c * hw * (2 * in_itemsize + 3 * compute_itemsize)
    t = 1024
    while t > 8 and t * per_row > budget_bytes:
        t //= 2
    # Keep >= 2 grid steps so the "parallel" batch axis can shard across both
    # v7x TensorCores (and the input pipeline stays double-buffered).
    if n > 8:
        two_step = ((pl.cdiv(n, 2) + 7) // 8) * 8
        t = min(t, two_step)
    n_pad8 = ((n + 7) // 8) * 8
    return max(8, min(t, n_pad8))


def num_branch_forward(x_nchw, conv_w, conv_b, lin_w, lin_b, *,
                       tile_n=None, compute_dtype=None):
    """x_nchw: (N, C, H, W); conv_w: (IC, C, 1, 1); conv_b: (IC,);
    lin_w: (nlane, IC); lin_b: (nlane,).  Returns (N, nlane) f32."""
    N, C, H, W = x_nchw.shape
    IC = conv_w.shape[0]
    nlane = lin_w.shape[0]
    HW = H * W

    if compute_dtype is None:
        compute_dtype = _default_compute_dtype()

    # Fuse conv1x1 and Linear (exact composition of two affine maps).
    w1 = conv_w.reshape(IC, C).astype(jnp.float32)           # (IC, C)
    w2 = lin_w.astype(jnp.float32)                           # (nlane, IC)
    w_fused = w1.T @ w2.T                                     # (C, nlane)
    b_fused = conv_b.astype(jnp.float32) @ w2.T + lin_b.astype(jnp.float32)

    # Lane-dense output: pad the fused weight/bias to a 128-lane multiple.
    npad = max(128, ((nlane + 127) // 128) * 128)
    w_pad = jnp.zeros((C, npad), jnp.float32).at[:, :nlane].set(w_fused)
    w_pad = w_pad.astype(jnp.bfloat16)                        # MXU-friendly
    b_pad = jnp.zeros((1, npad), jnp.float32).at[:, :nlane].set(
        b_fused.reshape(1, nlane))

    # Stream x in its native dtype (no extra HBM copy); the reshape is a view.
    x_flat = x_nchw.reshape(N, C, HW)

    if tile_n is None:
        tile_n = _pick_tile_n(N, C, HW,
                              jnp.dtype(x_flat.dtype).itemsize,
                              jnp.dtype(compute_dtype).itemsize)
    tile_n = max(8, ((tile_n + 7) // 8) * 8)   # sublane-align the output block

    grid = (pl.cdiv(N, tile_n),)               # ragged last block is OOB-masked

    kernel = partial(num_branch_kernel, compute_dtype=compute_dtype)

    out = pl.pallas_call(
        kernel,
        out_shape=jax.ShapeDtypeStruct((N, npad), jnp.float32),
        grid=grid,
        in_specs=[
            pl.BlockSpec((tile_n, C, HW), lambda i: (i, 0, 0)),  # streamed x
            pl.BlockSpec((C, npad), lambda i: (0, 0)),           # resident W
            pl.BlockSpec((1, npad), lambda i: (0, 0)),           # resident b
        ],
        out_specs=pl.BlockSpec((tile_n, npad), lambda i: (i, 0)),
        compiler_params=pltpu.CompilerParams(
            dimension_semantics=("parallel",),   # megacore sharding on v7x
            vmem_limit_bytes=48 * 1024 * 1024),
    )(x_flat, w_pad, b_pad)
    return out[:N, :nlane]


def num_branch_reference(x_nchw, conv_w, conv_b, lin_w, lin_b):
    """Pure-JAX f32 reference matching the PyTorch forward."""
    N, C, H, W = x_nchw.shape
    IC = conv_w.shape[0]
    s = jax.nn.softmax(x_nchw.astype(jnp.float32), axis=1)
    pooled = jnp.max(s.reshape(N, C, H * W), axis=2)               # (N, C)
    h = pooled @ conv_w.reshape(IC, C).T.astype(jnp.float32) + conv_b
    return h @ lin_w.T.astype(jnp.float32) + lin_b                 # (N, nlane)


if __name__ == "__main__":
    # Module-consistent small shapes: channels=16 -> inter_channels=4, nlane=4.
    N, C, H, W = 16, 16, 16, 16
    nlane = 4
    IC = C // 4

    key = jax.random.PRNGKey(0)
    kx, kw1, kb1, kw2, kb2 = jax.random.split(key, 5)

    x = jax.random.normal(kx, (N, C, H, W), dtype=jnp.float32)
    conv_w = jax.random.normal(kw1, (IC, C, 1, 1), dtype=jnp.float32) * 0.1
    conv_b = jax.random.normal(kb1, (IC,), dtype=jnp.float32) * 0.1
    lin_w = jax.random.normal(kw2, (nlane, IC), dtype=jnp.float32) * 0.1
    lin_b = jax.random.normal(kb2, (nlane,), dtype=jnp.float32) * 0.1

    # Auto tile (-> tile_n=8, grid of 2 steps: exercises the streamed pipeline).
    out = num_branch_forward(x, conv_w, conv_b, lin_w, lin_b)
    out = jax.block_until_ready(out)
    assert out.shape == (N, nlane)

    # Check vs the exact f32 forward (tolerance covers optional bf16 compute
    # on v6e/v7x and the bf16 MXU inputs).
    ref = num_branch_reference(x, conv_w, conv_b, lin_w, lin_b)
    assert jnp.allclose(out, ref, atol=2e-2, rtol=2e-2), (
        float(jnp.max(jnp.abs(out - ref))))

    print("KERNEL_OK")
</pallas_src>

<mosaic_0001>
module attributes {stable_mosaic.version = 11 : i64} {
  func.func @num_branch_kernel(%arg0: i32, %arg1: memref<8x16x256xf32, #tpu.memory_space<vmem>>, %arg2: memref<16x128xbf16, #tpu.memory_space<vmem>>, %arg3: memref<1x128xf32, #tpu.memory_space<vmem>>, %arg4: memref<8x128xf32, #tpu.memory_space<vmem>>) attributes {dimension_semantics = [#tpu.dimension_semantics<parallel>], iteration_bounds = array<i64: 2>, scalar_prefetch = 0 : i64, scratch_operands = 0 : i64, tpu.core_type = #tpu.core_type<tc>, window_params = [{transform_indices = @transform_0, window_bounds = array<i64: 8, 16, 256>}, {pipeline_mode = #tpu.pipeline_mode<synchronous>, transform_indices = @transform_1, window_bounds = array<i64: 16, 128>}, {pipeline_mode = #tpu.pipeline_mode<synchronous>, transform_indices = @transform_2, window_bounds = array<i64: 1, 128>}, {transform_indices = @transform_3, window_bounds = array<i64: 8, 128>}]} {
    %c0 = arith.constant 0 : index
    %c0_0 = arith.constant 0 : index
    %c0_1 = arith.constant 0 : index
    %0 = vector.load %arg1[%c0, %c0_0, %c0_1] : memref<8x16x256xf32, #tpu.memory_space<vmem>>, vector<8x16x256xf32>
    %cst = arith.constant dense<0xFF800000> : vector<8x256xf32>
    %1 = vector.multi_reduction <maximumf>, %0, %cst [1] : vector<8x16x256xf32> to vector<8x256xf32>
    %2 = vector.shape_cast %1 : vector<8x256xf32> to vector<8x1x256xf32>
    %3 = vector.broadcast %2 : vector<8x1x256xf32> to vector<8x16x256xf32>
    %4 = arith.subf %0, %3 : vector<8x16x256xf32>
    %5 = math.exp %4 : vector<8x16x256xf32>
    %cst_2 = arith.constant dense<0.000000e+00> : vector<8x256xf32>
    %6 = vector.multi_reduction <add>, %5, %cst_2 [1] : vector<8x16x256xf32> to vector<8x256xf32>
    %7 = vector.shape_cast %6 : vector<8x256xf32> to vector<8x1x256xf32>
    %8 = math.log %7 : vector<8x1x256xf32>
    %9 = arith.addf %2, %8 : vector<8x1x256xf32>
    %10 = vector.broadcast %9 : vector<8x1x256xf32> to vector<8x16x256xf32>
    %11 = arith.subf %0, %10 : vector<8x16x256xf32>
    %cst_3 = arith.constant dense<0xFF800000> : vector<8x16xf32>
    %12 = vector.multi_reduction <maximumf>, %11, %cst_3 [2] : vector<8x16x256xf32> to vector<8x16xf32>
    %13 = math.exp %12 : vector<8x16xf32>
    %14 = arith.truncf %13 : vector<8x16xf32> to vector<8x16xbf16>
    %c0_4 = arith.constant 0 : index
    %c0_5 = arith.constant 0 : index
    %15 = vector.load %arg2[%c0_4, %c0_5] : memref<16x128xbf16, #tpu.memory_space<vmem>>, vector<16x128xbf16>
    %cst_6 = arith.constant dense<0.000000e+00> : vector<8x128xf32>
    %16 = tpu.matmul %14, %15, %cst_6 {dimension_numbers = #tpu.dot_dimension_numbers<[1], [0], [0], [1], [0, 0, 1, 1], [], []>} : vector<8x16xbf16>, vector<16x128xbf16>, vector<8x128xf32> -> vector<8x128xf32>
    %c0_7 = arith.constant 0 : index
    %c0_8 = arith.constant 0 : index
    %17 = vector.load %arg3[%c0_7, %c0_8] : memref<1x128xf32, #tpu.memory_space<vmem>>, vector<1x128xf32>
    %18 = vector.broadcast %17 : vector<1x128xf32> to vector<8x128xf32>
    %19 = arith.addf %16, %18 : vector<8x128xf32>
    %c0_9 = arith.constant 0 : index
    %c0_10 = arith.constant 0 : index
    %20 = vector.load %arg4[%c0_9, %c0_10] : memref<8x128xf32, #tpu.memory_space<vmem>>, vector<8x128xf32>
    tpu.vector_store %arg4[%c0_9, %c0_10], %19 {strides = array<i32>} : memref<8x128xf32, #tpu.memory_space<vmem>>, vector<8x128xf32>,
    return
  }
  func.func @transform_0(%arg0: i32) -> (i32, i32, i32) {
    %c0_i32 = arith.constant 0 : i32
    %c0_i32_0 = arith.constant 0 : i32
    %c0_i32_1 = arith.constant 0 : i32
    return %arg0, %c0_i32, %c0_i32_0 : i32, i32, i32
  }
  func.func @transform_1(%arg0: i32) -> (i32, i32) {
    %c0_i32 = arith.constant 0 : i32
    %c0_i32_0 = arith.constant 0 : i32
    %c0_i32_1 = arith.constant 0 : i32
    return %c0_i32, %c0_i32_0 : i32, i32
  }
  func.func @transform_2(%arg0: i32) -> (i32, i32) {
    %c0_i32 = arith.constant 0 : i32
    %c0_i32_0 = arith.constant 0 : i32
    %c0_i32_1 = arith.constant 0 : i32
    return %c0_i32, %c0_i32_0 : i32, i32
  }
  func.func @transform_3(%arg0: i32) -> (i32, i32) {
    %c0_i32 = arith.constant 0 : i32
    %c0_i32_0 = arith.constant 0 : i32
    return %arg0, %c0_i32 : i32, i32
  }
}

</mosaic_0001>

<llo_original>
// kernel: tpu_custom_call.1
$region0: #{tpu_custom_call.1}
  #allocation0 [shape = 'u32[]', space=smem, size = 0x4, offset = 0x4, fixed_abs, tag = 'smem constant byte address 0x4 - core index']
  #allocation1 [shape = 'u32[72,128]{1,0:T(1,128)}', space=vmem, size = 0x9000, scoped, tag = 'internal scratch']
  %s0 = inlined_call_operand.hbm [shape: f32[16,16,256], index: 0, kind: input, shape index: {}]
  %s1 = inlined_call_operand.hbm [shape: bf16[16,128], index: 1, kind: input, shape index: {}]
  %s2 = inlined_call_operand.vmem [shape: f32[1,128], index: 2, kind: input, shape index: {}]
  %s3 = inlined_call_operand.hbm [shape: f32[16,128], index: 3, kind: output, shape index: {}]
  %s4 = sld [smem:[#allocation0]]
  $region53: #{tpu_custom_call.1} parent=0
    _
  %s6 = ssub.s32 1, %s4
  %s7 = scalar_select 0, %s6, %s4
  $region1: #{tpu_custom_call.1} parent=0
    #allocation2 [shape = 'u8[262144]{0}', space=vmem, size = 0x40000, scoped, tag = 'input window, operand 0']
    #allocation3 [shape = 's32[2]{0}', space=sflag, size = 0x8, scoped, tag = 'scoped memory for tpu_custom_call.1']
    #allocation4 [shape = 's32[2]{0}', space=sflag, size = 0x8, scoped, tag = 'scoped memory for tpu_custom_call.1']
    #allocation5 [shape = 'u8[4096]{0}', space=vmem, size = 0x1000, scoped, tag = 'input window, operand 1, single buffered']
    #allocation6 [shape = 's32[1]{0}', space=sflag, size = 0x4, scoped, tag = 'scoped memory for tpu_custom_call.1']
    #allocation7 [shape = 'u8[8192]{0}', space=vmem, size = 0x2000, scoped, tag = 'output window, operand 0']
    %8 = vsyncpa [#allocation3], 0
    %s9 = scalar_lea.sflag [#allocation3], 1
    %10 = vsyncpa %s9, 0
    %11 = vsyncpa [#allocation6], 0
    %12 = vsyncpa [#allocation4], 0
    %s13 = scalar_lea.sflag [#allocation4], 1
    %14 = vsyncpa %s13, 0
    loop: start=0, step=1, limit=4
    $region2: #{tpu_custom_call.1} parent=1 // loop_pre_header
      _
    $region3: #{tpu_custom_call.1} parent=1 // loop_header
      %s16 = sphi 0, %s20
      %p17 = scmp.ge.s32.totalorder %s16, 4
      %s26 = sphi 0, %s28
      %s29 = sphi 0, %s26
      %s30 = sphi 0, %s29
      %s46 = sphi 0, %s30
      %s50 = sphi 0, %s50
      %s52 = sphi 0, %s50
      %s53 = sphi 0, %s52
      %s67 = sphi 0, %s53
      %s71 = sphi 0, %s71
      %s73 = sphi 0, %s71
      %s74 = sphi 0, %s73
      %s88 = sphi 0, %s74
      %s94 = sphi 0, %s96
      %s97 = sphi 0, %s94
      %s98 = sphi 0, %s97
      %s114 = sphi 0, %s98
    $region4: #{tpu_custom_call.1} parent=1 // loop_header_branch
      %19 = sbr.rel (%p17) target = $region8
    $region5: #{tpu_custom_call.1} parent=1 // loop_body
      %s21 = ssub.s32 %s16, 1
      %s22 = ssub.s32 %s16, 2
      %s23 = sadd.s32 %s16, 1
      %s24 = ssub.s32 %s16, %s23
      %p25 = scmp.eq.s32.totalorder %s24, 0
      %s27 = sadd.s32 %s26, 1
      %s28 = scalar_select %p25, %s26, %s27
      %p31 = pneg %p25
      %p32 = scmp.eq.s32.totalorder %s16, 1
      %p33 = por %p31, %p32
      %p34 = scmp.ne.s32.totalorder %s26, %s29
      %p35 = scmp.eq.s32.totalorder %s16, 0
      %p36 = por %p34, %p35
      %p37 = scmp.ne.s32.totalorder %s26, %s29
      %p38 = scmp.eq.s32.totalorder %s21, 1
      %p39 = por %p37, %p38
      %p40 = scmp.ne.s32.totalorder %s29, %s30
      %p41 = scmp.eq.s32.totalorder %s21, 0
      %p42 = por %p40, %p41
      %p43 = scmp.ne.s32.totalorder %s29, %s30
      %p44 = scmp.eq.s32.totalorder %s22, 1
      %p45 = por %p43, %p44
      %p47 = scmp.ne.s32.totalorder %s30, %s46
      %p48 = scmp.eq.s32.totalorder %s22, 0
      %p49 = por %p47, %p48
      %s51 = sadd.s32 %s50, 1
      %p54 = scmp.eq.s32.totalorder %s16, 1
      %p55 = scmp.ne.s32.totalorder %s50, %s52
      %p56 = scmp.eq.s32.totalorder %s16, 0
      %p57 = por %p55, %p56
      %p58 = scmp.ne.s32.totalorder %s50, %s52
      %p59 = scmp.eq.s32.totalorder %s21, 1
      %p60 = por %p58, %p59
      %p61 = scmp.ne.s32.totalorder %s52, %s53
      %p62 = scmp.eq.s32.totalorder %s21, 0
      %p63 = por %p61, %p62
      %p64 = scmp.ne.s32.totalorder %s52, %s53
      %p65 = scmp.eq.s32.totalorder %s22, 1
      %p66 = por %p64, %p65
      %p68 = scmp.ne.s32.totalorder %s53, %s67
      %p69 = scmp.eq.s32.totalorder %s22, 0
      %p70 = por %p68, %p69
      %s72 = sadd.s32 %s71, 1
      %p75 = scmp.eq.s32.totalorder %s16, 1
      %p76 = scmp.ne.s32.totalorder %s71, %s73
      %p77 = scmp.eq.s32.totalorder %s16, 0
      %p78 = por %p76, %p77
      %p79 = scmp.ne.s32.totalorder %s71, %s73
      %p80 = scmp.eq.s32.totalorder %s21, 1
      %p81 = por %p79, %p80
      %p82 = scmp.ne.s32.totalorder %s73, %s74
      %p83 = scmp.eq.s32.totalorder %s21, 0
      %p84 = por %p82, %p83
      %p85 = scmp.ne.s32.totalorder %s73, %s74
      %p86 = scmp.eq.s32.totalorder %s22, 1
      %p87 = por %p85, %p86
      %p89 = scmp.ne.s32.totalorder %s74, %s88
      %p90 = scmp.eq.s32.totalorder %s22, 0
      %p91 = por %p89, %p90
      %s92 = ssub.s32 %s16, %s23
      %p93 = scmp.eq.s32.totalorder %s92, 0
      %s95 = sadd.s32 %s94, 1
      %s96 = scalar_select %p93, %s94, %s95
      %p99 = pneg %p93
      %p100 = scmp.eq.s32.totalorder %s16, 1
      %p101 = por %p99, %p100
      %p102 = scmp.ne.s32.totalorder %s94, %s97
      %p103 = scmp.eq.s32.totalorder %s16, 0
      %p104 = por %p102, %p103
      %p105 = scmp.ne.s32.totalorder %s94, %s97
      %p106 = scmp.eq.s32.totalorder %s21, 1
      %p107 = por %p105, %p106
      %p108 = scmp.ne.s32.totalorder %s97, %s98
      %p109 = scmp.eq.s32.totalorder %s21, 0
      %p110 = por %p108, %p109
      %p111 = scmp.ne.s32.totalorder %s97, %s98
      %p112 = scmp.eq.s32.totalorder %s22, 1
      %p113 = por %p111, %p112
      %p115 = scmp.ne.s32.totalorder %s98, %s114
      %p116 = scmp.eq.s32.totalorder %s22, 0
      %p117 = por %p115, %p116
      %p118 = scmp.le.s32.totalorder 1, %s16
      %p119 = scmp.lt.s32.totalorder %s16, 3
      %p120 = pnand %p118, %p119
      %p121 = pneg %p120
      // Predicated region
      $region9: #{tpu_custom_call.1} parent=5 // pred_check
        _
      $region10: #{tpu_custom_call.1} parent=5 // pred_check_branch
        %123 = sbr.rel (%p120) target = $region12
      $region11: #{tpu_custom_call.1} parent=5 // pred_region
        %s124 = ssub.s32 %s16, 1
        // Predicated region
        $region13: #{tpu_custom_call.1} parent=11 // pred_check
          %p125 = pneg %p63
        $region14: #{tpu_custom_call.1} parent=11 // pred_check_branch
          %127 = sbr.rel (%p125) target = $region16
        $region15: #{tpu_custom_call.1} parent=11 // pred_region
          %129 = vsyncadd [#allocation6], 0
          %s130 = sshll.u32 %s1, 4
          %s131 = int_to_ptr.hbm [resolvable:$true] %s130
          %s132 = sshll.u32 [#allocation5], 4
          %s133 = int_to_ptr.vmem [resolvable:$true] %s132
          %138 = dma.hbm_to_vmem [thread:$0]  %s131, 128, %s133, [#allocation6], 64, 64, 4
        $region16: #{tpu_custom_call.1} parent=11 // pred_fallthru
          _
        // Predicated region
        $region17: #{tpu_custom_call.1} parent=11 // pred_check
          %p139 = pneg %p84
        $region18: #{tpu_custom_call.1} parent=11 // pred_check_branch
          %141 = sbr.rel (%p139) target = $region20
        $region19: #{tpu_custom_call.1} parent=11 // pred_region
          _
        $region20: #{tpu_custom_call.1} parent=11 // pred_fallthru
          _
      $region12: #{tpu_custom_call.1} parent=5 // pred_fallthru
        _
      %p142 = scmp.lt.s32.totalorder %s16, 2
      // Predicated region
      $region21: #{tpu_custom_call.1} parent=5 // pred_check
        %p143 = pneg %p142
      $region22: #{tpu_custom_call.1} parent=5 // pred_check_branch
        %145 = sbr.rel (%p143) target = $region24
      $region23: #{tpu_custom_call.1} parent=5 // pred_region
        // Predicated region
        $region25: #{tpu_custom_call.1} parent=23 // pred_check
          %p146 = pneg %p36
        $region26: #{tpu_custom_call.1} parent=23 // pred_check_branch
          %148 = sbr.rel (%p146) target = $region28
        $region27: #{tpu_custom_call.1} parent=23 // pred_region
          %s149 = sand.u32 %s26, 1
          %s150 = scalar_lea.sflag [#allocation3], %s149
          %s151 = sand.u32 %s26, 1
          %s152 = smul.addr %s151, 256
          %s153 = scalar_lea.vmem [#allocation2], %s152
          %s154 = smul.u32 8, %s16
          %156 = vsyncadd %s150, 0
          %s157 = smul.addr %s154, 4
          %s158 = smul.addr %s157, 8
          %s159 = scalar_lea.hbm %s0, %s158
          %s160 = sshll.u32 %s159, 4
          %s161 = int_to_ptr.hbm [resolvable:$true] %s160
          %s162 = sshll.u32 %s153, 4
          %s163 = int_to_ptr.vmem [resolvable:$true] %s162
          %168 = dma.hbm_to_vmem [thread:$0]  %s161, 4096, %s163, %s150, 256, 256, 16
        $region28: #{tpu_custom_call.1} parent=23 // pred_fallthru
          _
      $region24: #{tpu_custom_call.1} parent=5 // pred_fallthru
        _
      %p169 = scmp.le.s32.totalorder 1, %s16
      %p170 = scmp.lt.s32.totalorder %s16, 3
      %p171 = pnand %p169, %p170
      %p172 = pneg %p171
      // Predicated region
      $region29: #{tpu_custom_call.1} parent=5 // pred_check
        _
      $region30: #{tpu_custom_call.1} parent=5 // pred_check_branch
        %174 = sbr.rel (%p171) target = $region32
      $region31: #{tpu_custom_call.1} parent=5 // pred_region
        %s175 = ssub.s32 %s16, 1
        %s176 = sand.u32 %s29, 1
        %s177 = scalar_lea.sflag [#allocation3], %s176
        %s178 = sand.u32 %s29, 1
        %s179 = smul.addr %s178, 256
        %s180 = scalar_lea.vmem [#allocation2], %s179
        // Predicated region
        $region33: #{tpu_custom_call.1} parent=31 // pred_check
          %p181 = pneg %p42
        $region34: #{tpu_custom_call.1} parent=31 // pred_check_branch
          %183 = sbr.rel (%p181) target = $region36
        $region35: #{tpu_custom_call.1} parent=31 // pred_region
          %185 = dma.done %s177, 4096
        $region36: #{tpu_custom_call.1} parent=31 // pred_fallthru
          _
        // Predicated region
        $region37: #{tpu_custom_call.1} parent=31 // pred_check
          %p186 = pneg %p63
        $region38: #{tpu_custom_call.1} parent=31 // pred_check_branch
          %188 = sbr.rel (%p186) target = $region40
        $region39: #{tpu_custom_call.1} parent=31 // pred_region
          %190 = dma.done [#allocation6], 128
        $region40: #{tpu_custom_call.1} parent=31 // pred_fallthru
          _
        %s191 = sand.u32 %s29, 1
        %s192 = scalar_lea.sflag [#allocation3], %s191
        %s193 = sand.u32 %s29, 1
        %s194 = smul.addr %s193, 256
        %s195 = scalar_lea.vmem [#allocation2], %s194
        %p196 = pneg %p42
        %p197 = pneg %p39
        %p198 = pneg %p63
        %p199 = pneg %p60
        %p200 = pneg %p84
        %p201 = pneg %p81
        %p202 = pneg %p110
        %p203 = pneg %p107
        %s204 = sand.u32 %s97, 1
        %s205 = scalar_lea.sflag [#allocation4], %s204
        %s206 = sand.u32 %s97, 1
        %s207 = smul.addr %s206, 8
        %s208 = scalar_lea.vmem [#allocation7], %s207
        %s209 = smul.u32 8, %s21
        %v211 = vld [vmem:[%s180] sm:$0xff]
        %v212 = vld [vmem:[%s180 + $0x8] sm:$0xff]
        %v213 = vld [vmem:[%s180 + $0x10] sm:$0xff]
        %v214 = vld [vmem:[%s180 + $0x18] sm:$0xff]
        %v215 = vld [vmem:[%s180 + $0x20] sm:$0xff]
        %v216 = vld [vmem:[%s180 + $0x28] sm:$0xff]
        %v217 = vld [vmem:[%s180 + $0x30] sm:$0xff]
        %v218 = vld [vmem:[%s180 + $0x38] sm:$0xff]
        %v219 = vld [vmem:[%s180 + $0x40] sm:$0xff]
        %v220 = vld [vmem:[%s180 + $0x48] sm:$0xff]
        %v221 = vld [vmem:[%s180 + $0x50] sm:$0xff]
        %v222 = vld [vmem:[%s180 + $0x58] sm:$0xff]
        %v223 = vld [vmem:[%s180 + $0x60] sm:$0xff]
        %v224 = vld [vmem:[%s180 + $0x68] sm:$0xff]
        %v225 = vld [vmem:[%s180 + $0x70] sm:$0xff]
        %v226 = vld [vmem:[%s180 + $0x78] sm:$0xff]
        %v227 = vld [vmem:[%s180 + $0x80] sm:$0xff]
        %v228 = vld [vmem:[%s180 + $0x88] sm:$0xff]
        %v229 = vld [vmem:[%s180 + $0x90] sm:$0xff]
        %v230 = vld [vmem:[%s180 + $0x98] sm:$0xff]
        %v231 = vld [vmem:[%s180 + $0xa0] sm:$0xff]
        %v232 = vld [vmem:[%s180 + $0xa8] sm:$0xff]
        %v233 = vld [vmem:[%s180 + $0xb0] sm:$0xff]
        %v234 = vld [vmem:[%s180 + $0xb8] sm:$0xff]
        %v235 = vld [vmem:[%s180 + $0xc0] sm:$0xff]
        %v236 = vld [vmem:[%s180 + $0xc8] sm:$0xff]
        %v237 = vld [vmem:[%s180 + $0xd0] sm:$0xff]
        %v238 = vld [vmem:[%s180 + $0xd8] sm:$0xff]
        %v239 = vld [vmem:[%s180 + $0xe0] sm:$0xff]
        %v240 = vld [vmem:[%s180 + $0xe8] sm:$0xff]
        %v241 = vld [vmem:[%s180 + $0xf0] sm:$0xff]
        %v242 = vld [vmem:[%s180 + $0xf8] sm:$0xff]
        %v243 = vmax.f32 %v211, %v213
        %v244 = vrot.slane %v243, 4
        %v245 = vmax.f32 %v243, %v244
        %v246 = vrot.slane %v245, 2
        %v247 = vmax.f32 %v245, %v246
        %v248 = vrot.slane %v247, 1
        %v249 = vmax.f32 %v247, %v248
        %v250 = vmax.f32 %v212, %v214
        %v251 = vrot.slane %v250, 4
        %v252 = vmax.f32 %v250, %v251
        %v253 = vrot.slane %v252, 2
        %v254 = vmax.f32 %v252, %v253
        %v255 = vrot.slane %v254, 1
        %v256 = vmax.f32 %v254, %v255
        %v257 = vmax.f32 %v215, %v217
        %v258 = vrot.slane %v257, 4
        %v259 = vmax.f32 %v257, %v258
        %v260 = vrot.slane %v259, 2
        %v261 = vmax.f32 %v259, %v260
        %v262 = vrot.slane %v261, 1
        %v263 = vmax.f32 %v261, %v262
        %v264 = vmax.f32 %v216, %v218
        %v265 = vrot.slane %v264, 4
        %v266 = vmax.f32 %v264, %v265
        %v267 = vrot.slane %v266, 2
        %v268 = vmax.f32 %v266, %v267
        %v269 = vrot.slane %v268, 1
        %v270 = vmax.f32 %v268, %v269
        %v271 = vmax.f32 %v219, %v221
        %v272 = vrot.slane %v271, 4
        %v273 = vmax.f32 %v271, %v272
        %v274 = vrot.slane %v273, 2
        %v275 = vmax.f32 %v273, %v274
        %v276 = vrot.slane %v275, 1
        %v277 = vmax.f32 %v275, %v276
        %v278 = vmax.f32 %v220, %v222
        %v279 = vrot.slane %v278, 4
        %v280 = vmax.f32 %v278, %v279
        %v281 = vrot.slane %v280, 2
        %v282 = vmax.f32 %v280, %v281
        %v283 = vrot.slane %v282, 1
        %v284 = vmax.f32 %v282, %v283
        %v285 = vmax.f32 %v223, %v225
        %v286 = vrot.slane %v285, 4
        %v287 = vmax.f32 %v285, %v286
        %v288 = vrot.slane %v287, 2
        %v289 = vmax.f32 %v287, %v288
        %v290 = vrot.slane %v289, 1
        %v291 = vmax.f32 %v289, %v290
        %v292 = vmax.f32 %v224, %v226
        %v293 = vrot.slane %v292, 4
        %v294 = vmax.f32 %v292, %v293
        %v295 = vrot.slane %v294, 2
        %v296 = vmax.f32 %v294, %v295
        %v297 = vrot.slane %v296, 1
        %v298 = vmax.f32 %v296, %v297
        %v299 = vmax.f32 %v227, %v229
        %v300 = vrot.slane %v299, 4
        %v301 = vmax.f32 %v299, %v300
        %v302 = vrot.slane %v301, 2
        %v303 = vmax.f32 %v301, %v302
        %v304 = vrot.slane %v303, 1
        %v305 = vmax.f32 %v303, %v304
        %v306 = vmax.f32 %v228, %v230
        %v307 = vrot.slane %v306, 4
        %v308 = vmax.f32 %v306, %v307
        %v309 = vrot.slane %v308, 2
        %v310 = vmax.f32 %v308, %v309
        %v311 = vrot.slane %v310, 1
        %v312 = vmax.f32 %v310, %v311
        %v313 = vmax.f32 %v231, %v233
        %v314 = vrot.slane %v313, 4
        %v315 = vmax.f32 %v313, %v314
        %v316 = vrot.slane %v315, 2
        %v317 = vmax.f32 %v315, %v316
        %v318 = vrot.slane %v317, 1
        %v319 = vmax.f32 %v317, %v318
        %v320 = vmax.f32 %v232, %v234
        %v321 = vrot.slane %v320, 4
        %v322 = vmax.f32 %v320, %v321
        %v323 = vrot.slane %v322, 2
        %v324 = vmax.f32 %v322, %v323
        %v325 = vrot.slane %v324, 1
        %v326 = vmax.f32 %v324, %v325
        %v327 = vmax.f32 %v235, %v237
        %v328 = vrot.slane %v327, 4
        %v329 = vmax.f32 %v327, %v328
        %v330 = vrot.slane %v329, 2
        %v331 = vmax.f32 %v329, %v330
        %v332 = vrot.slane %v331, 1
        %v333 = vmax.f32 %v331, %v332
        %v334 = vmax.f32 %v236, %v238
        %v335 = vrot.slane %v334, 4
        %v336 = vmax.f32 %v334, %v335
        %v337 = vrot.slane %v336, 2
        %v338 = vmax.f32 %v336, %v337
        %v339 = vrot.slane %v338, 1
        %v340 = vmax.f32 %v338, %v339
        %v341 = vmax.f32 %v239, %v241
        %v342 = vrot.slane %v341, 4
        %v343 = vmax.f32 %v341, %v342
        %v344 = vrot.slane %v343, 2
        %v345 = vmax.f32 %v343, %v344
        %v346 = vrot.slane %v345, 1
        %v347 = vmax.f32 %v345, %v346
        %v348 = vmax.f32 %v240, %v242
        %v349 = vrot.slane %v348, 4
        %v350 = vmax.f32 %v348, %v349
        %v351 = vrot.slane %v350, 2
        %v352 = vmax.f32 %v350, %v351
        %v353 = vrot.slane %v352, 1
        %v354 = vmax.f32 %v352, %v353
        %v355 = vsub.f32 %v211, %v249
        %v356 = vsub.f32 %v212, %v256
        %v357 = vsub.f32 %v213, %v249
        %v358 = vsub.f32 %v214, %v256
        %v359 = vsub.f32 %v215, %v263
        %v360 = vsub.f32 %v216, %v270
        %v361 = vsub.f32 %v217, %v263
        %v362 = vsub.f32 %v218, %v270
        %v363 = vsub.f32 %v219, %v277
        %v364 = vsub.f32 %v220, %v284
        %v365 = vsub.f32 %v221, %v277
        %v366 = vsub.f32 %v222, %v284
        %v367 = vsub.f32 %v223, %v291
        %v368 = vsub.f32 %v224, %v298
        %v369 = vsub.f32 %v225, %v291
        %v370 = vsub.f32 %v226, %v298
        %v371 = vsub.f32 %v227, %v305
        %v372 = vsub.f32 %v228, %v312
        %v373 = vsub.f32 %v229, %v305
        %v374 = vsub.f32 %v230, %v312
        %v375 = vsub.f32 %v231, %v319
        %v376 = vsub.f32 %v232, %v326
        %v377 = vsub.f32 %v233, %v319
        %v378 = vsub.f32 %v234, %v326
        %v379 = vsub.f32 %v235, %v333
        %v380 = vsub.f32 %v236, %v340
        %v381 = vsub.f32 %v237, %v333
        %v382 = vsub.f32 %v238, %v340
        %v383 = vsub.f32 %v239, %v347
        %v384 = vsub.f32 %v240, %v354
        %v385 = vsub.f32 %v241, %v347
        %v386 = vsub.f32 %v242, %v354
        %v387 = vmul.f32 %v355, 1.442695
        %v388 = vpow.pop %v387
        %v389 = vmul.f32 %v356, 1.442695
        %v390 = vpow.pop %v389
        %v391 = vmul.f32 %v357, 1.442695
        %v392 = vpow.pop %v391
        %v393 = vmul.f32 %v358, 1.442695
        %v394 = vpow.pop %v393
        %v395 = vmul.f32 %v359, 1.442695
        %v396 = vpow.pop %v395
        %v397 = vmul.f32 %v360, 1.442695
        %v398 = vpow.pop %v397
        %v399 = vmul.f32 %v361, 1.442695
        %v400 = vpow.pop %v399
        %v401 = vmul.f32 %v362, 1.442695
        %v402 = vpow.pop %v401
        %v403 = vmul.f32 %v363, 1.442695
        %v404 = vpow.pop %v403
        %v405 = vmul.f32 %v364, 1.442695
        %v406 = vpow.pop %v405
        %v407 = vmul.f32 %v365, 1.442695
        %v408 = vpow.pop %v407
        %v409 = vmul.f32 %v366, 1.442695
        %v410 = vpow.pop %v409
        %v411 = vmul.f32 %v367, 1.442695
        %v412 = vpow.pop %v411
        %v413 = vmul.f32 %v368, 1.442695
        %v414 = vpow.pop %v413
        %v415 = vmul.f32 %v369, 1.442695
        %v416 = vpow.pop %v415
        %v417 = vmul.f32 %v370, 1.442695
        %v418 = vpow.pop %v417
        %v419 = vmul.f32 %v371, 1.442695
        %v420 = vpow.pop %v419
        %v421 = vmul.f32 %v372, 1.442695
        %v422 = vpow.pop %v421
        %v423 = vmul.f32 %v373, 1.442695
        %v424 = vpow.pop %v423
        %v425 = vmul.f32 %v374, 1.442695
        %v426 = vpow.pop %v425
        %v427 = vmul.f32 %v375, 1.442695
        %v428 = vpow.pop %v427
        %v429 = vmul.f32 %v376, 1.442695
        %v430 = vpow.pop %v429
        %v431 = vmul.f32 %v377, 1.442695
        %v432 = vpow.pop %v431
        %v433 = vmul.f32 %v378, 1.442695
        %v434 = vpow.pop %v433
        %v435 = vmul.f32 %v379, 1.442695
        %v436 = vpow.pop %v435
        %v437 = vmul.f32 %v380, 1.442695
        %v438 = vpow.pop %v437
        %v439 = vmul.f32 %v381, 1.442695
        %v440 = vpow.pop %v439
        %v441 = vmul.f32 %v382, 1.442695
        %v442 = vpow.pop %v441
        %v443 = vmul.f32 %v383, 1.442695
        %v444 = vpow.pop %v443
        %v445 = vmul.f32 %v384, 1.442695
        %v446 = vpow.pop %v445
        %v447 = vmul.f32 %v385, 1.442695
        %v448 = vpow.pop %v447
        %v449 = vmul.f32 %v386, 1.442695
        %v450 = vpow.pop %v449
        %v451 = vadd.f32 %v388, %v392
        %v452 = vrot.slane %v451, 4
        %v453 = vadd.f32 %v451, %v452
        %v454 = vrot.slane %v453, 2
        %v455 = vadd.f32 %v453, %v454
        %v456 = vrot.slane %v455, 1
        %v457 = vadd.f32 %v455, %v456
        %v458 = vadd.f32 %v390, %v394
        %v459 = vrot.slane %v458, 4
        %v460 = vadd.f32 %v458, %v459
        %v461 = vrot.slane %v460, 2
        %v462 = vadd.f32 %v460, %v461
        %v463 = vrot.slane %v462, 1
        %v464 = vadd.f32 %v462, %v463
        %v465 = vadd.f32 %v396, %v400
        %v466 = vrot.slane %v465, 4
        %v467 = vadd.f32 %v465, %v466
        %v468 = vrot.slane %v467, 2
        %v469 = vadd.f32 %v467, %v468
        %v470 = vrot.slane %v469, 1
        %v471 = vadd.f32 %v469, %v470
        %v472 = vadd.f32 %v398, %v402
        %v473 = vrot.slane %v472, 4
        %v474 = vadd.f32 %v472, %v473
        %v475 = vrot.slane %v474, 2
        %v476 = vadd.f32 %v474, %v475
        %v477 = vrot.slane %v476, 1
        %v478 = vadd.f32 %v476, %v477
        %v479 = vadd.f32 %v404, %v408
        %v480 = vrot.slane %v479, 4
        %v481 = vadd.f32 %v479, %v480
        %v482 = vrot.slane %v481, 2
        %v483 = vadd.f32 %v481, %v482
        %v484 = vrot.slane %v483, 1
        %v485 = vadd.f32 %v483, %v484
        %v486 = vadd.f32 %v406, %v410
        %v487 = vrot.slane %v486, 4
        %v488 = vadd.f32 %v486, %v487
        %v489 = vrot.slane %v488, 2
        %v490 = vadd.f32 %v488, %v489
        %v491 = vrot.slane %v490, 1
        %v492 = vadd.f32 %v490, %v491
        %v493 = vadd.f32 %v412, %v416
        %v494 = vrot.slane %v493, 4
        %v495 = vadd.f32 %v493, %v494
        %v496 = vrot.slane %v495, 2
        %v497 = vadd.f32 %v495, %v496
        %v498 = vrot.slane %v497, 1
        %v499 = vadd.f32 %v497, %v498
        %v500 = vadd.f32 %v414, %v418
        %v501 = vrot.slane %v500, 4
        %v502 = vadd.f32 %v500, %v501
        %v503 = vrot.slane %v502, 2
        %v504 = vadd.f32 %v502, %v503
        %v505 = vrot.slane %v504, 1
        %v506 = vadd.f32 %v504, %v505
        %v507 = vadd.f32 %v420, %v424
        %v508 = vrot.slane %v507, 4
        %v509 = vadd.f32 %v507, %v508
        %v510 = vrot.slane %v509, 2
        %v511 = vadd.f32 %v509, %v510
        %v512 = vrot.slane %v511, 1
        %v513 = vadd.f32 %v511, %v512
        %v514 = vadd.f32 %v422, %v426
        %v515 = vrot.slane %v514, 4
        %v516 = vadd.f32 %v514, %v515
        %v517 = vrot.slane %v516, 2
        %v518 = vadd.f32 %v516, %v517
        %v519 = vrot.slane %v518, 1
        %v520 = vadd.f32 %v518, %v519
        %v521 = vadd.f32 %v428, %v432
        %v522 = vrot.slane %v521, 4
        %v523 = vadd.f32 %v521, %v522
        %v524 = vrot.slane %v523, 2
        %v525 = vadd.f32 %v523, %v524
        %v526 = vrot.slane %v525, 1
        %v527 = vadd.f32 %v525, %v526
        %v528 = vadd.f32 %v430, %v434
        %v529 = vrot.slane %v528, 4
        %v530 = vadd.f32 %v528, %v529
        %v531 = vrot.slane %v530, 2
        %v532 = vadd.f32 %v530, %v531
        %v533 = vrot.slane %v532, 1
        %v534 = vadd.f32 %v532, %v533
        %v535 = vadd.f32 %v436, %v440
        %v536 = vrot.slane %v535, 4
        %v537 = vadd.f32 %v535, %v536
        %v538 = vrot.slane %v537, 2
        %v539 = vadd.f32 %v537, %v538
        %v540 = vrot.slane %v539, 1
        %v541 = vadd.f32 %v539, %v540
        %v542 = vadd.f32 %v438, %v442
        %v543 = vrot.slane %v542, 4
        %v544 = vadd.f32 %v542, %v543
        %v545 = vrot.slane %v544, 2
        %v546 = vadd.f32 %v544, %v545
        %v547 = vrot.slane %v546, 1
        %v548 = vadd.f32 %v546, %v547
        %v549 = vadd.f32 %v444, %v448
        %v550 = vrot.slane %v549, 4
        %v551 = vadd.f32 %v549, %v550
        %v552 = vrot.slane %v551, 2
        %v553 = vadd.f32 %v551, %v552
        %v554 = vrot.slane %v553, 1
        %v555 = vadd.f32 %v553, %v554
        %v556 = vadd.f32 %v446, %v450
        %v557 = vrot.slane %v556, 4
        %v558 = vadd.f32 %v556, %v557
        %v559 = vrot.slane %v558, 2
        %v560 = vadd.f32 %v558, %v559
        %v561 = vrot.slane %v560, 1
        %v562 = vadd.f32 %v560, %v561
        %v563 = vlog2.pop %v457
        %v564 = vmul.f32 %v563, 0.6931472
        %v565 = vlog2.pop %v464
        %v566 = vmul.f32 %v565, 0.6931472
        %v567 = vlog2.pop %v471
        %v568 = vmul.f32 %v567, 0.6931472
        %v569 = vlog2.pop %v478
        %v570 = vmul.f32 %v569, 0.6931472
        %v571 = vlog2.pop %v485
        %v572 = vmul.f32 %v571, 0.6931472
        %v573 = vlog2.pop %v492
        %v574 = vmul.f32 %v573, 0.6931472
        %v575 = vlog2.pop %v499
        %v576 = vmul.f32 %v575, 0.6931472
        %v577 = vlog2.pop %v506
        %v578 = vmul.f32 %v577, 0.6931472
        %v579 = vlog2.pop %v513
        %v580 = vmul.f32 %v579, 0.6931472
        %v581 = vlog2.pop %v520
        %v582 = vmul.f32 %v581, 0.6931472
        %v583 = vlog2.pop %v527
        %v584 = vmul.f32 %v583, 0.6931472
        %v585 = vlog2.pop %v534
        %v586 = vmul.f32 %v585, 0.6931472
        %v587 = vlog2.pop %v541
        %v588 = vmul.f32 %v587, 0.6931472
        %v589 = vlog2.pop %v548
        %v590 = vmul.f32 %v589, 0.6931472
        %v591 = vlog2.pop %v555
        %v592 = vmul.f32 %v591, 0.6931472
        %v593 = vlog2.pop %v562
        %v594 = vmul.f32 %v593, 0.6931472
        %v595 = vadd.f32 %v249, %v564
        %v596 = vadd.f32 %v256, %v566
        %v597 = vadd.f32 %v263, %v568
        %v598 = vadd.f32 %v270, %v570
        %v599 = vadd.f32 %v277, %v572
        %v600 = vadd.f32 %v284, %v574
        %v601 = vadd.f32 %v291, %v576
        %v602 = vadd.f32 %v298, %v578
        %v603 = vadd.f32 %v305, %v580
        %v604 = vadd.f32 %v312, %v582
        %v605 = vadd.f32 %v319, %v584
        %v606 = vadd.f32 %v326, %v586
        %v607 = vadd.f32 %v333, %v588
        %v608 = vadd.f32 %v340, %v590
        %v609 = vadd.f32 %v347, %v592
        %v610 = vadd.f32 %v354, %v594
        %v611 = vsub.f32 %v211, %v595
        %v612 = vsub.f32 %v212, %v596
        %v613 = vsub.f32 %v213, %v595
        %v614 = vsub.f32 %v214, %v596
        %v615 = vsub.f32 %v215, %v597
        %v616 = vsub.f32 %v216, %v598
        %v617 = vsub.f32 %v217, %v597
        %v618 = vsub.f32 %v218, %v598
        %v619 = vsub.f32 %v219, %v599
        %v620 = vsub.f32 %v220, %v600
        %v621 = vsub.f32 %v221, %v599
        %v622 = vsub.f32 %v222, %v600
        %v623 = vsub.f32 %v223, %v601
        %v624 = vsub.f32 %v224, %v602
        %v625 = vsub.f32 %v225, %v601
        %v626 = vsub.f32 %v226, %v602
        %v627 = vsub.f32 %v227, %v603
        %v628 = vsub.f32 %v228, %v604
        %v629 = vsub.f32 %v229, %v603
        %v630 = vsub.f32 %v230, %v604
        %v631 = vsub.f32 %v231, %v605
        %v632 = vsub.f32 %v232, %v606
        %v633 = vsub.f32 %v233, %v605
        %v634 = vsub.f32 %v234, %v606
        %v635 = vsub.f32 %v235, %v607
        %v636 = vsub.f32 %v236, %v608
        %v637 = vsub.f32 %v237, %v607
        %v638 = vsub.f32 %v238, %v608
        %v639 = vsub.f32 %v239, %v609
        %v640 = vsub.f32 %v240, %v610
        %v641 = vsub.f32 %v241, %v609
        %v642 = vsub.f32 %v242, %v610
        %v643 = vmax.f32 %v611, %v612
        %644 = vmax.xlane.f32.xlu0 %v643
        %v645 = vpop.xlane.xlu0 %644
        %v646 = vmax.f32 %v613, %v614
        %647 = vmax.xlane.f32.xlu0 %v646
        %v648 = vpop.xlane.xlu0 %647
        %v649 = vmax.f32 %v615, %v616
        %650 = vmax.xlane.f32.xlu0 %v649
        %v651 = vpop.xlane.xlu0 %650
        %v652 = vmax.f32 %v617, %v618
        %653 = vmax.xlane.f32.xlu0 %v652
        %v654 = vpop.xlane.xlu0 %653
        %v655 = vmax.f32 %v619, %v620
        %656 = vmax.xlane.f32.xlu0 %v655
        %v657 = vpop.xlane.xlu0 %656
        %v658 = vmax.f32 %v621, %v622
        %659 = vmax.xlane.f32.xlu0 %v658
        %v660 = vpop.xlane.xlu0 %659
        %v661 = vmax.f32 %v623, %v624
        %662 = vmax.xlane.f32.xlu0 %v661
        %v663 = vpop.xlane.xlu0 %662
        %v664 = vmax.f32 %v625, %v626
        %665 = vmax.xlane.f32.xlu0 %v664
        %v666 = vpop.xlane.xlu0 %665
        %v667 = vmax.f32 %v627, %v628
        %668 = vmax.xlane.f32.xlu0 %v667
        %v669 = vpop.xlane.xlu0 %668
        %v670 = vmax.f32 %v629, %v630
        %671 = vmax.xlane.f32.xlu0 %v670
        %v672 = vpop.xlane.xlu0 %671
        %v673 = vmax.f32 %v631, %v632
        %674 = vmax.xlane.f32.xlu0 %v673
        %v675 = vpop.xlane.xlu0 %674
        %v676 = vmax.f32 %v633, %v634
        %677 = vmax.xlane.f32.xlu0 %v676
        %v678 = vpop.xlane.xlu0 %677
        %v679 = vmax.f32 %v635, %v636
        %680 = vmax.xlane.f32.xlu0 %v679
        %v681 = vpop.xlane.xlu0 %680
        %v682 = vmax.f32 %v637, %v638
        %683 = vmax.xlane.f32.xlu0 %v682
        %v684 = vpop.xlane.xlu0 %683
        %v685 = vmax.f32 %v639, %v640
        %686 = vmax.xlane.f32.xlu0 %v685
        %v687 = vpop.xlane.xlu0 %686
        %v688 = vmax.f32 %v641, %v642
        %689 = vmax.xlane.f32.xlu0 %v688
        %v690 = vpop.xlane.xlu0 %689
        %v691 = vmul.f32 %v645, 1.442695
        %v692 = vpow.pop %v691
        %v693 = vmul.f32 %v648, 1.442695
        %v694 = vpow.pop %v693
        %v695 = vmul.f32 %v651, 1.442695
        %v696 = vpow.pop %v695
        %v697 = vmul.f32 %v654, 1.442695
        %v698 = vpow.pop %v697
        %v699 = vmul.f32 %v657, 1.442695
        %v700 = vpow.pop %v699
        %v701 = vmul.f32 %v660, 1.442695
        %v702 = vpow.pop %v701
        %v703 = vmul.f32 %v663, 1.442695
        %v704 = vpow.pop %v703
        %v705 = vmul.f32 %v666, 1.442695
        %v706 = vpow.pop %v705
        %v707 = vmul.f32 %v669, 1.442695
        %v708 = vpow.pop %v707
        %v709 = vmul.f32 %v672, 1.442695
        %v710 = vpow.pop %v709
        %v711 = vmul.f32 %v675, 1.442695
        %v712 = vpow.pop %v711
        %v713 = vmul.f32 %v678, 1.442695
        %v714 = vpow.pop %v713
        %v715 = vmul.f32 %v681, 1.442695
        %v716 = vpow.pop %v715
        %v717 = vmul.f32 %v684, 1.442695
        %v718 = vpow.pop %v717
        %v719 = vmul.f32 %v687, 1.442695
        %v720 = vpow.pop %v719
        %v721 = vmul.f32 %v690, 1.442695
        %v722 = vpow.pop %v721
        %v723 = vpack.c.bf16 %v694, %v692
        %v724 = vpack.c.bf16 %v698, %v696
        %v725 = vpack.c.bf16 %v702, %v700
        %v726 = vpack.c.bf16 %v706, %v704
        %v727 = vpack.c.bf16 %v710, %v708
        %v728 = vpack.c.bf16 %v714, %v712
        %v729 = vpack.c.bf16 %v718, %v716
        %v730 = vpack.c.bf16 %v722, %v720
        %v731 = vld [vmem:[#allocation5] sm:$0xf]
        %v732 = vld [vmem:[#allocation5 + $0x4] sm:$0xf]
        %v733 = vld [vmem:[%s2] sm:$0x1]
        %v735 = vperm.slane %v733, 0
        %v745 = vunpack.c.l.b16 %v723
        %v746 = vunpack.c.h.b16 %v723
        %v747 = vunpack.c.l.b16 %v724
        %v748 = vunpack.c.h.b16 %v724
        %v749 = vunpack.c.l.b16 %v725
        %v750 = vunpack.c.h.b16 %v725
        %v751 = vunpack.c.l.b16 %v726
        %v752 = vunpack.c.h.b16 %v726
        %v753 = vunpack.c.l.b16 %v727
        %v754 = vunpack.c.h.b16 %v727
        %v755 = vunpack.c.l.b16 %v728
        %v756 = vunpack.c.h.b16 %v728
        %v757 = vunpack.c.l.b16 %v729
        %v758 = vunpack.c.h.b16 %v729
        %v759 = vunpack.c.l.b16 %v730
        %v760 = vunpack.c.h.b16 %v730
        %v761 = vlaneseq
        %v762 = vand.u32 %v761, 127
        %v763 = vperm.slane %v745, %v762
        %v764 = vadd.s32 %v762, 4294967288
        %v765 = vperm.slane %v746, %v764
        %vm766 = vcmask 130112
        %v767 = vsel %vm766, %v765, %v763
        %v768 = vperm.slane %v747, %v762
        %v769 = vperm.slane %v748, %v764
        %v770 = vsel %vm766, %v769, %v768
        %v771 = vperm.slane %v749, %v762
        %v772 = vperm.slane %v750, %v764
        %v773 = vsel %vm766, %v772, %v771
        %v774 = vperm.slane %v751, %v762
        %v775 = vperm.slane %v752, %v764
        %v776 = vsel %vm766, %v775, %v774
        %v777 = vperm.slane %v753, %v762
        %v778 = vperm.slane %v754, %v764
        %v779 = vsel %vm766, %v778, %v777
        %v780 = vperm.slane %v755, %v762
        %v781 = vperm.slane %v756, %v764
        %v782 = vsel %vm766, %v781, %v780
        %v783 = vperm.slane %v757, %v762
        %v784 = vperm.slane %v758, %v764
        %v785 = vsel %vm766, %v784, %v783
        %v786 = vperm.slane %v759, %v762
        %v787 = vperm.slane %v760, %v764
        %v788 = vsel %vm766, %v787, %v786
        %vm789 = vcmask 1041409
        %v790 = vsel %vm789, %v770, %v767
        %vm791 = vcmask 1042434
        %v792 = vsel %vm791, %v773, %v790
        %vm793 = vcmask 1043459
        %v794 = vsel %vm793, %v776, %v792
        %vm795 = vcmask 1044484
        %v796 = vsel %vm795, %v779, %v794
        %vm797 = vcmask 1045509
        %v798 = vsel %vm797, %v782, %v796
        %vm799 = vcmask 1046534
        %v800 = vsel %vm799, %v785, %v798
        %vm801 = vcmask 1047559
        %v802 = vsel %vm801, %v788, %v800
        %v803 = vpack.c.b16 %v802, %v802
        %v806 = vunpack.c.l.b16 %v731
        %v807 = vunpack.c.l.b16 %v732
        %v808 = vpack.c.b16 %v807, %v806
        %vm810 = vcmask 130048
        %v812 = vsel %vm810, %v803, 0
        %814 = vmatpush.bf16.msra.mxu0 0
        %815 = vmatpush.bf16.msra.mxu0 0
        %816 = vmatpush.bf16.msra.mxu0 0
        %817 = vmatpush.bf16.msra.mxu0 0
        %818 = vmatpush.bf16.msra.mxu0 0
        %819 = vmatpush.bf16.msra.mxu0 0
        %820 = vmatpush.bf16.msra.mxu0 0
        %821 = vmatpush.bf16.msra.mxu0 %v808
        %822 = vmatmul.bf16.gmra.mxu0 %v812
        %v823 = vpop.f32.mrf.mxu0
        %v824 = vadd.f32 %v735, %v823
        %v825 = vpop.f32.mrf.mxu0
        %826 = vdwg.mxu0
        %827 = vst [vmem:[%s208] sm:$0xff] %v824
        %s828 = sand.u32 %s97, 1
        %s829 = scalar_lea.sflag [#allocation4], %s828
        %s830 = sand.u32 %s97, 1
        %s831 = smul.addr %s830, 8
        %s832 = scalar_lea.vmem [#allocation7], %s831
        // Predicated region
        $region41: #{tpu_custom_call.1} parent=31 // pred_check
          %p833 = pneg %p107
        $region42: #{tpu_custom_call.1} parent=31 // pred_check_branch
          %835 = sbr.rel (%p833) target = $region44
        $region43: #{tpu_custom_call.1} parent=31 // pred_region
          %837 = vsyncadd %s829, 0
          %s838 = smul.addr %s21, 8
          %s839 = scalar_lea.hbm %s3, %s838
          %s841 = sshll.u32 %s832, 4
          %s842 = int_to_ptr.vmem [resolvable:$true] %s841
          %s843 = sshll.u32 %s839, 4
          %s844 = int_to_ptr.hbm [resolvable:$true] %s843
          %846 = dma.vmem_to_hbm [thread:$0]  %s842, 128, %s844, %s829
        $region44: #{tpu_custom_call.1} parent=31 // pred_fallthru
          _
      $region32: #{tpu_custom_call.1} parent=5 // pred_fallthru
        _
      %p847 = scmp.le.s32.totalorder 2, %s16
      // Predicated region
      $region45: #{tpu_custom_call.1} parent=5 // pred_check
        %p848 = pneg %p847
      $region46: #{tpu_custom_call.1} parent=5 // pred_check_branch
        %850 = sbr.rel (%p848) target = $region48
      $region47: #{tpu_custom_call.1} parent=5 // pred_region
        %s851 = ssub.s32 %s16, 2
        // Predicated region
        $region49: #{tpu_custom_call.1} parent=47 // pred_check
          %p852 = pneg %p113
        $region50: #{tpu_custom_call.1} parent=47 // pred_check_branch
          %854 = sbr.rel (%p852) target = $region52
        $region51: #{tpu_custom_call.1} parent=47 // pred_region
          %s855 = sand.u32 %s98, 1
          %s856 = scalar_lea.sflag [#allocation4], %s855
          %s857 = sand.u32 %s98, 1
          %s858 = smul.addr %s857, 8
          %s859 = scalar_lea.vmem [#allocation7], %s858
          %861 = dma.done %s856, 128
        $region52: #{tpu_custom_call.1} parent=47 // pred_fallthru
          _
      $region48: #{tpu_custom_call.1} parent=5 // pred_fallthru
        _
    $region6: #{tpu_custom_call.1} parent=1 // loop_footer
      %s20 = sadd.s32 1, %s16
    $region7: #{tpu_custom_call.1} parent=1 // loop_footer_branch
      %15 = sbr.rel target = $region3
    $region8: #{tpu_custom_call.1} parent=1 // loop_exit
      _
    %862 = vsyncpa [#allocation3], 1
    %s863 = scalar_lea.sflag [#allocation3], 1
    %864 = vsyncpa %s863, 1
    %865 = vsyncpa [#allocation6], 1
    %866 = vsyncpa [#allocation4], 1
    %s867 = scalar_lea.sflag [#allocation4], 1
    %868 = vsyncpa %s867, 1

</llo_original>
